<compile_context>
chip_gen: v6e
topology: v6e:2x2x1
jax: 0.10.0
libtpu: 0.0.40
codegen_flags: <defaults>
</compile_context>

<pallas_src>
import jax
import jax.numpy as jnp
from jax.experimental import pallas as pl
from jax.experimental.pallas import tpu as pltpu


def _round_up(x, m):
    return ((x + m - 1) // m) * m


def _pick_divisor(n, candidates):
    for c in candidates:
        if n % c == 0:
            return c
    return n


def _vmem_limit(block_nbytes):
    # double-buffered blocks + margin; clamp to a range legal on
    # v5e (128 MiB phys / 16 MiB default scoped), v6e (128/32), v7x (64/32).
    need = 2 * block_nbytes + (2 << 20)
    return int(min(max(need, 24 << 20), 48 << 20))


# ---------------------------------------------------------------------------
# Kernel 1: hoisted input projection  gx = x @ W_ih^T + b  (fully parallel)
# ---------------------------------------------------------------------------
def _in_proj_kernel(x_ref, w_ref, b_ref, o_ref):
    o_ref[...] = (
        jnp.dot(x_ref[...], w_ref[...], preferred_element_type=jnp.float32)
        + b_ref[...]
    ).astype(o_ref.dtype)


# ---------------------------------------------------------------------------
# Kernel 2: GRU recurrence.  grid = (batch blocks [parallel], time blocks
# [arbitrary]); the hidden state lives in a VMEM scratch across the time axis.
# ---------------------------------------------------------------------------
def _make_recurrence_kernel(Hp, t_blk, b_tile, last_tb, last_s, mm_dtype):

    def kernel(gx_ref, whh_rz_ref, whh_n_ref, bhn_ref,
               hs_ref, hlast_ref, h_scr):
        tb = pl.program_id(1)              # time axis (innermost, "arbitrary")

        @pl.when(tb == 0)                  # also resets per batch block
        def _():
            h_scr[...] = jnp.zeros_like(h_scr)

        whh_rz = whh_rz_ref[...]           # (Hp, 2Hp) held across T_BLK steps
        whh_n = whh_n_ref[...]             # (Hp,  Hp)
        # hoist the n-gate bias broadcast out of the unrolled loop
        bhn = jnp.broadcast_to(bhn_ref[...], (b_tile, Hp))

        h = h_scr[...]                     # (B_TILE, Hp) f32

        # statically unrolled timestep loop (LLO sees the whole schedule)
        for s in range(t_blk):
            gx = gx_ref[s]                 # dense (B_TILE, 3Hp) read
            hm = h.astype(mm_dtype)
            gh_rz = jnp.dot(hm, whh_rz, preferred_element_type=jnp.float32)
            r = jax.nn.sigmoid(gx[:, 0:Hp] + gh_rz[:, 0:Hp])
            z = jax.nn.sigmoid(gx[:, Hp:2 * Hp] + gh_rz[:, Hp:2 * Hp])
            gh_n = jnp.dot(hm, whh_n, preferred_element_type=jnp.float32)
            n = jnp.tanh(gx[:, 2 * Hp:3 * Hp] + r * (gh_n + bhn))
            h = n + z * (h - n)            # == (1-z)*n + z*h
            hs_ref[s] = h                  # dense (B_TILE, Hp) full-tile store

            if s == last_s:                # static: only one scf.if emitted
                @pl.when(tb == last_tb)
                def _(h=h):
                    hlast_ref[...] = h

        h_scr[...] = h

    return kernel


# ---------------------------------------------------------------------------
# One-time parameter prep (padding, transposes, bias folding)
# ---------------------------------------------------------------------------
def prepare_params(params, hidden_dim, use_bf16_matmul=False):
    H = hidden_dim
    Hp = _round_up(H, 128)
    pad_h = Hp - H
    f32 = jnp.float32
    w_ih, w_hh = params["w_ih"], params["w_hh"]
    b_ih, b_hh = params["b_ih"], params["b_hh"]
    E = w_ih.shape[1]

    w_ih3 = jnp.pad(w_ih.astype(f32).reshape(3, H, E),
                    ((0, 0), (0, pad_h), (0, 0)))
    wih_t = w_ih3.reshape(3 * Hp, E).T                    # (E, 3Hp)

    w_hh3 = jnp.pad(w_hh.astype(f32).reshape(3, H, H),
                    ((0, 0), (0, pad_h), (0, pad_h)))
    whh_t = w_hh3.reshape(3 * Hp, Hp).T                   # (Hp, 3Hp)

    b_ih3 = jnp.pad(b_ih.astype(f32).reshape(3, H), ((0, 0), (0, pad_h)))
    b_hh3 = jnp.pad(b_hh.astype(f32).reshape(3, H), ((0, 0), (0, pad_h)))
    # fold the r/z parts of b_hh into the hoisted input-projection bias;
    # only the n gate needs b_hh applied after the r* multiply.
    b_fold = b_ih3.at[0:2].add(b_hh3[0:2]).reshape(1, 3 * Hp)
    bhn = b_hh3[2].reshape(1, Hp)

    mm_dtype = jnp.bfloat16 if use_bf16_matmul else f32
    return {
        "embedding": params["embedding"].astype(f32),
        "wih_t": wih_t.astype(mm_dtype),
        "whh_rz": whh_t[:, :2 * Hp].astype(mm_dtype),
        "whh_n": whh_t[:, 2 * Hp:].astype(mm_dtype),
        "b_fold": b_fold,                                 # f32
        "bhn": bhn,                                       # f32
        "H": H, "Hp": Hp, "E": E,
        "mm_dtype": mm_dtype,
    }


# ---------------------------------------------------------------------------
# Forward
# ---------------------------------------------------------------------------
def gru_pallas(emb_tbe, prep):
    """emb_tbe: time-major embeddings (T, B, E) float32."""
    T, B, E = emb_tbe.shape
    H, Hp = prep["H"], prep["Hp"]
    mm_dtype = prep["mm_dtype"]
    mm_bytes = jnp.dtype(mm_dtype).itemsize
    f32 = jnp.float32
    G3 = 3 * Hp

    Bp = _round_up(max(B, 8), 8)
    B_TILE = _pick_divisor(Bp, (512, 256, 128, 64, 32, 16, 8))

    T_BLK = _pick_divisor(T, (128, 64, 32, 16, 8))
    if T_BLK == T and T > 128:
        # long T with no small divisor: block + pad instead of one giant slab
        T_BLK = 64
    Tp = _round_up(T, T_BLK)

    # padded rows / timesteps are zeros and sliced away after the kernels
    emb_p = jnp.zeros((Tp, Bp, E), f32).at[:T, :B].set(emb_tbe.astype(f32))

    # --- hoisted input projection: one parallel matmul over Tp*Bp rows ------
    M = Tp * Bp
    x2d = emb_p.reshape(M, E).astype(mm_dtype)            # free reshape
    TM = _pick_divisor(M, (512, 256, 128, 64, 32, 16))
    # TODO(synk): for very large 3Hp (H >= ~2k) add an N-tiling grid axis here.
    in_proj_bytes = (TM * E * mm_bytes + E * G3 * mm_bytes
                     + G3 * 4 + TM * G3 * 4)
    gx2d = pl.pallas_call(
        _in_proj_kernel,
        out_shape=jax.ShapeDtypeStruct((M, G3), f32),
        grid_spec=pltpu.PrefetchScalarGridSpec(
            num_scalar_prefetch=0,
            grid=(M // TM,),
            in_specs=[
                pl.BlockSpec((TM, E), lambda i: (i, 0)),
                pl.BlockSpec((E, G3), lambda i: (0, 0)),
                pl.BlockSpec((1, G3), lambda i: (0, 0)),
            ],
            out_specs=pl.BlockSpec((TM, G3), lambda i: (i, 0)),
        ),
        compiler_params=pltpu.CompilerParams(
            dimension_semantics=("parallel",),
            vmem_limit_bytes=_vmem_limit(in_proj_bytes)),
    )(x2d, prep["wih_t"], prep["b_fold"])
    gx_tbg = gx2d.reshape(Tp, Bp, G3)                     # stays time-major

    # --- serial recurrence ---------------------------------------------------
    last_tb = (T - 1) // T_BLK
    last_s = (T - 1) % T_BLK
    kernel = _make_recurrence_kernel(Hp, T_BLK, B_TILE, last_tb, last_s,
                                     mm_dtype)
    rec_bytes = (T_BLK * B_TILE * G3 * 4                  # gx block
                 + Hp * 2 * Hp * mm_bytes + Hp * Hp * mm_bytes + Hp * 4
                 + T_BLK * B_TILE * Hp * 4                # hs block
                 + 2 * B_TILE * Hp * 4)                   # h_last + scratch

    hs_p, hlast_p = pl.pallas_call(
        kernel,
        out_shape=(
            jax.ShapeDtypeStruct((Tp, Bp, Hp), f32),
            jax.ShapeDtypeStruct((Bp, Hp), f32),
        ),
        grid_spec=pltpu.PrefetchScalarGridSpec(
            num_scalar_prefetch=0,
            grid=(Bp // B_TILE, Tp // T_BLK),
            in_specs=[
                pl.BlockSpec((T_BLK, B_TILE, G3), lambda bi, tb: (tb, bi, 0)),
                pl.BlockSpec((Hp, 2 * Hp), lambda bi, tb: (0, 0)),
                pl.BlockSpec((Hp, Hp), lambda bi, tb: (0, 0)),
                pl.BlockSpec((1, Hp), lambda bi, tb: (0, 0)),
            ],
            out_specs=[
                pl.BlockSpec((T_BLK, B_TILE, Hp), lambda bi, tb: (tb, bi, 0)),
                pl.BlockSpec((B_TILE, Hp), lambda bi, tb: (bi, 0)),
            ],
            scratch_shapes=[pltpu.VMEM((B_TILE, Hp), f32)],
        ),
        compiler_params=pltpu.CompilerParams(
            dimension_semantics=("parallel", "arbitrary"),
            vmem_limit_bytes=_vmem_limit(rec_bytes)),
    )(gx_tbg, prep["whh_rz"], prep["whh_n"], prep["bhn"])

    # single wrapper-side transpose back to batch_first
    hs = jnp.transpose(hs_p[:T, :B, :H], (1, 0, 2))       # (B, T, H)
    h = hlast_p[:B, :H][None]                              # (1, B, H)
    return hs, h


def encoder_forward(seq, prep):
    """seq: (B, T) int32 token ids.  Mirrors Encoder.forward."""
    # TODO(synk): embedding gather (data-dependent random access) stays in JAX.
    emb_tbe = prep["embedding"][seq.T]                     # time-major (T,B,E)
    return gru_pallas(emb_tbe, prep)


def init_params(key, vocab_size, embedding_dim, hidden_dim, padding_idx):
    k1, k2, k3, k4, k5 = jax.random.split(key, 5)
    emb = jax.random.normal(k1, (vocab_size, embedding_dim), jnp.float32)
    emb = emb.at[padding_idx].set(0.0)                     # padding_idx row = 0
    s = 1.0 / jnp.sqrt(hidden_dim)
    w_ih = jax.random.uniform(k2, (3 * hidden_dim, embedding_dim), jnp.float32, -s, s)
    w_hh = jax.random.uniform(k3, (3 * hidden_dim, hidden_dim), jnp.float32, -s, s)
    b_ih = jax.random.uniform(k4, (3 * hidden_dim,), jnp.float32, -s, s)
    b_hh = jax.random.uniform(k5, (3 * hidden_dim,), jnp.float32, -s, s)
    return {"embedding": emb, "w_ih": w_ih, "w_hh": w_hh,
            "b_ih": b_ih, "b_hh": b_hh}


def _reference_forward(seq, params, hidden_dim):
    """Pure-JAX reference of PyTorch GRU semantics for verification."""
    emb = params["embedding"][seq]
    B, T, E = emb.shape
    H = hidden_dim
    w_ih, w_hh = params["w_ih"], params["w_hh"]
    b_ih, b_hh = params["b_ih"], params["b_hh"]

    def step(h, x):
        gx = x @ w_ih.T + b_ih
        gh = h @ w_hh.T + b_hh
        r = jax.nn.sigmoid(gx[:, :H] + gh[:, :H])
        z = jax.nn.sigmoid(gx[:, H:2 * H] + gh[:, H:2 * H])
        n = jnp.tanh(gx[:, 2 * H:] + r * gh[:, 2 * H:])
        h_new = (1 - z) * n + z * h
        return h_new, h_new

    h0 = jnp.zeros((B, H), jnp.float32)
    h_last, hs = jax.lax.scan(step, h0, jnp.transpose(emb, (1, 0, 2)))
    return jnp.transpose(hs, (1, 0, 2)), h_last[None]


if __name__ == "__main__":
    # small, module-consistent shapes
    vocab_size, embedding_dim, hidden_dim = 20, 16, 32
    B, T = 2, 8
    CHAR2ID = {' ': 0}

    key = jax.random.PRNGKey(0)
    pkey, skey = jax.random.split(key)
    params = init_params(pkey, vocab_size, embedding_dim, hidden_dim, CHAR2ID[' '])
    seq = jax.random.randint(skey, (B, T), 0, vocab_size, dtype=jnp.int32)

    hs_ref, h_ref = _reference_forward(seq, params, hidden_dim)

    # f32 MXU operands: strict check vs the reference.
    prep32 = prepare_params(params, hidden_dim, use_bf16_matmul=False)
    hs, h = encoder_forward(seq, prep32)
    hs, h = jax.block_until_ready(hs), jax.block_until_ready(h)
    assert hs.shape == (B, T, hidden_dim) and h.shape == (1, B, hidden_dim)
    assert jnp.allclose(hs, hs_ref, atol=1e-4), "hs mismatch vs reference (f32)"
    assert jnp.allclose(h, h_ref, atol=1e-4), "h mismatch vs reference (f32)"

    # bf16 MXU operands (f32 accumulation / gates / state): relaxed check.
    prep16 = prepare_params(params, hidden_dim, use_bf16_matmul=True)
    hs16, h16 = encoder_forward(seq, prep16)
    hs16, h16 = jax.block_until_ready(hs16), jax.block_until_ready(h16)
    assert jnp.allclose(hs16, hs_ref, atol=5e-2), "hs mismatch vs reference (bf16)"
    assert jnp.allclose(h16, h_ref, atol=5e-2), "h mismatch vs reference (bf16)"

    print("KERNEL_OK")
</pallas_src>

<mosaic_0001>
module attributes {stable_mosaic.version = 11 : i64} {
  func.func @_in_proj_kernel(%arg0: i32, %arg1: memref<64x16xf32, #tpu.memory_space<vmem>>, %arg2: memref<16x384xf32, #tpu.memory_space<vmem>>, %arg3: memref<1x384xf32, #tpu.memory_space<vmem>>, %arg4: memref<64x384xf32, #tpu.memory_space<vmem>>) attributes {dimension_semantics = [#tpu.dimension_semantics<parallel>], iteration_bounds = array<i64: 1>, scalar_prefetch = 0 : i64, scratch_operands = 0 : i64, tpu.core_type = #tpu.core_type<tc>, window_params = [{transform_indices = @transform_0, window_bounds = array<i64: 64, 16>}, {pipeline_mode = #tpu.pipeline_mode<synchronous>, transform_indices = @transform_1, window_bounds = array<i64: 16, 384>}, {pipeline_mode = #tpu.pipeline_mode<synchronous>, transform_indices = @transform_2, window_bounds = array<i64: 1, 384>}, {transform_indices = @transform_3, window_bounds = array<i64: 64, 384>}]} {
    %c0 = arith.constant 0 : index
    %c0_0 = arith.constant 0 : index
    %0 = vector.load %arg1[%c0, %c0_0] : memref<64x16xf32, #tpu.memory_space<vmem>>, vector<64x16xf32>
    %c0_1 = arith.constant 0 : index
    %c0_2 = arith.constant 0 : index
    %1 = vector.load %arg2[%c0_1, %c0_2] : memref<16x384xf32, #tpu.memory_space<vmem>>, vector<16x384xf32>
    %cst = arith.constant dense<0.000000e+00> : vector<64x384xf32>
    %2 = tpu.matmul %0, %1, %cst {dimension_numbers = #tpu.dot_dimension_numbers<[1], [0], [0], [1], [0, 0, 1, 1], [], []>} : vector<64x16xf32>, vector<16x384xf32>, vector<64x384xf32> -> vector<64x384xf32>
    %c0_3 = arith.constant 0 : index
    %c0_4 = arith.constant 0 : index
    %3 = vector.load %arg3[%c0_3, %c0_4] : memref<1x384xf32, #tpu.memory_space<vmem>>, vector<1x384xf32>
    %4 = vector.broadcast %3 : vector<1x384xf32> to vector<64x384xf32>
    %5 = arith.addf %2, %4 : vector<64x384xf32>
    %c0_5 = arith.constant 0 : index
    %c0_6 = arith.constant 0 : index
    %6 = vector.load %arg4[%c0_5, %c0_6] : memref<64x384xf32, #tpu.memory_space<vmem>>, vector<64x384xf32>
    tpu.vector_store %arg4[%c0_5, %c0_6], %5 {strides = array<i32>} : memref<64x384xf32, #tpu.memory_space<vmem>>, vector<64x384xf32>,
    return
  }
  func.func @transform_0(%arg0: i32) -> (i32, i32) {
    %c0_i32 = arith.constant 0 : i32
    %c0_i32_0 = arith.constant 0 : i32
    return %arg0, %c0_i32 : i32, i32
  }
  func.func @transform_1(%arg0: i32) -> (i32, i32) {
    %c0_i32 = arith.constant 0 : i32
    %c0_i32_0 = arith.constant 0 : i32
    %c0_i32_1 = arith.constant 0 : i32
    return %c0_i32, %c0_i32_0 : i32, i32
  }
  func.func @transform_2(%arg0: i32) -> (i32, i32) {
    %c0_i32 = arith.constant 0 : i32
    %c0_i32_0 = arith.constant 0 : i32
    %c0_i32_1 = arith.constant 0 : i32
    return %c0_i32, %c0_i32_0 : i32, i32
  }
  func.func @transform_3(%arg0: i32) -> (i32, i32) {
    %c0_i32 = arith.constant 0 : i32
    %c0_i32_0 = arith.constant 0 : i32
    return %arg0, %c0_i32 : i32, i32
  }
}

</mosaic_0001>

<llo_original>
// kernel: tpu_custom_call.1
$region0: #{tpu_custom_call.1}
  #allocation0 [shape = 'u32[]', space=smem, size = 0x4, offset = 0x4, fixed_abs, tag = 'smem constant byte address 0x4 - core index']
  #allocation1 [shape = 'u32[144,128]{1,0:T(1,128)}', space=vmem, size = 0x12000, scoped, tag = 'internal scratch']
  %s0 = inlined_call_operand.vmem [shape: f32[64,16], index: 0, kind: input, shape index: {}]
  %s1 = inlined_call_operand.vmem [shape: f32[16,384], index: 1, kind: input, shape index: {}]
  %s2 = inlined_call_operand.vmem [shape: f32[1,384], index: 2, kind: input, shape index: {}]
  %s3 = inlined_call_operand.hbm [shape: f32[64,384], index: 3, kind: output, shape index: {}]
  %s4 = sld [smem:[#allocation0]]
  $region22: #{tpu_custom_call.1} parent=0
    _
  %s6 = ssub.s32 1, %s4
  %s7 = scalar_select 0, %s6, %s4
  $region1: #{tpu_custom_call.1} parent=0
    #allocation2 [shape = 'u8[98304]{0}', space=vmem, size = 0x18000, scoped, tag = 'output window, operand 0, single buffered']
    #allocation3 [shape = 's32[1]{0}', space=sflag, size = 0x4, scoped, tag = 'scoped memory for tpu_custom_call.1']
    %8 = vsyncpa [#allocation3], 0
    // Predicated region
    $region2: #{tpu_custom_call.1} parent=1 // pred_check
      _
    $region3: #{tpu_custom_call.1} parent=1 // pred_check_branch
      %10 = sbr.rel (0) target = $region5
    $region4: #{tpu_custom_call.1} parent=1 // pred_region
      _
    $region5: #{tpu_custom_call.1} parent=1 // pred_fallthru
      _
    // Predicated region
    $region6: #{tpu_custom_call.1} parent=1 // pred_check
      _
    $region7: #{tpu_custom_call.1} parent=1 // pred_check_branch
      %12 = sbr.rel (0) target = $region9
    $region8: #{tpu_custom_call.1} parent=1 // pred_region
      _
    $region9: #{tpu_custom_call.1} parent=1 // pred_fallthru
      _
    // Predicated region
    $region10: #{tpu_custom_call.1} parent=1 // pred_check
      _
    $region11: #{tpu_custom_call.1} parent=1 // pred_check_branch
      %14 = sbr.rel (0) target = $region13
    $region12: #{tpu_custom_call.1} parent=1 // pred_region
      _
    $region13: #{tpu_custom_call.1} parent=1 // pred_fallthru
      _
    %v15 = vld [vmem:[%s0] sm:$0xff]
    %v16 = vld [vmem:[%s0 + $0x8] sm:$0xff]
    %v17 = vld [vmem:[%s0 + $0x10] sm:$0xff]
    %v18 = vld [vmem:[%s0 + $0x18] sm:$0xff]
    %v19 = vld [vmem:[%s0 + $0x20] sm:$0xff]
    %v20 = vld [vmem:[%s0 + $0x28] sm:$0xff]
    %v21 = vld [vmem:[%s0 + $0x30] sm:$0xff]
    %v22 = vld [vmem:[%s0 + $0x38] sm:$0xff]
    %v23 = vld [vmem:[%s1] sm:$0xff]
    %v24 = vld [vmem:[%s1 + $0x8] sm:$0xff]
    %v25 = vld [vmem:[%s1 + $0x10] sm:$0xff]
    %v26 = vld [vmem:[%s1 + $0x18] sm:$0xff]
    %v27 = vld [vmem:[%s1 + $0x20] sm:$0xff]
    %v28 = vld [vmem:[%s1 + $0x28] sm:$0xff]
    %v29 = vld [vmem:[%s2] sm:$0x7]
    %v31 = vlaneseq
    %v32 = vshrl.u32 %v31, 7
    %v33 = vsub.s32 0, %v32
    %v34 = vrot.slane %v29, %v33
    %v35 = vlaneseq
    %v36 = vshrl.u32 %v35, 7
    %v37 = vsub.s32 1, %v36
    %v38 = vrot.slane %v29, %v37
    %v39 = vlaneseq
    %v40 = vshrl.u32 %v39, 7
    %v41 = vsub.s32 2, %v40
    %v42 = vrot.slane %v29, %v41
    %vm46 = vcmask 130048
    %v48 = vsel %vm46, %v15, 0
    %v51 = vsel %vm46, %v16, 0
    %v54 = vsel %vm46, %v17, 0
    %v57 = vsel %vm46, %v18, 0
    %v60 = vsel %vm46, %v19, 0
    %v63 = vsel %vm46, %v20, 0
    %v66 = vsel %vm46, %v21, 0
    %v69 = vsel %vm46, %v22, 0
    %71 = vmatprep.subr.mxu0 0.0
    %72 = vmatpush1.msra.mxu0 0.0
    %73 = vmatprep.subr.mxu0 0.0
    %74 = vmatpush1.msra.mxu0 0.0
    %75 = vmatprep.subr.mxu0 0.0
    %76 = vmatpush1.msra.mxu0 0.0
    %77 = vmatprep.subr.mxu0 0.0
    %78 = vmatpush1.msra.mxu0 0.0
    %79 = vmatprep.subr.mxu0 0.0
    %80 = vmatpush1.msra.mxu0 0.0
    %81 = vmatprep.subr.mxu0 0.0
    %82 = vmatpush1.msra.mxu0 0.0
    %83 = vmatprep.subr.mxu0 0.0
    %84 = vmatpush1.msra.mxu0 0.0
    %85 = vmatprep.subr.mxu0 0.0
    %86 = vmatpush1.msra.mxu0 0.0
    %87 = vmatprep.subr.mxu0 0.0
    %88 = vmatpush1.msra.mxu0 0.0
    %89 = vmatprep.subr.mxu0 0.0
    %90 = vmatpush1.msra.mxu0 0.0
    %91 = vmatprep.subr.mxu0 0.0
    %92 = vmatpush1.msra.mxu0 0.0
    %93 = vmatprep.subr.mxu0 0.0
    %94 = vmatpush1.msra.mxu0 0.0
    %95 = vmatprep.subr.mxu0 0.0
    %96 = vmatpush1.msra.mxu0 0.0
    %97 = vmatprep.subr.mxu0 0.0
    %98 = vmatpush1.msra.mxu0 0.0
    %99 = vmatprep.subr.mxu0 %v27
    %100 = vmatpush1.msra.mxu0 %v26
    %101 = vmatprep.subr.mxu0 %v24
    %102 = vmatpush1.msra.mxu0 %v23
    %103 = vmatprep.subr.mxu0 0.0
    %104 = vmatpush2.msra.mxu0 0.0
    %105 = vmatprep.subr.mxu0 0.0
    %106 = vmatpush2.msra.mxu0 0.0
    %107 = vmatprep.subr.mxu0 0.0
    %108 = vmatpush2.msra.mxu0 0.0
    %109 = vmatprep.subr.mxu0 0.0
    %110 = vmatpush2.msra.mxu0 0.0
    %111 = vmatprep.subr.mxu0 0.0
    %112 = vmatpush2.msra.mxu0 0.0
    %113 = vmatprep.subr.mxu0 0.0
    %114 = vmatpush2.msra.mxu0 0.0
    %115 = vmatprep.subr.mxu0 0.0
    %116 = vmatpush2.msra.mxu0 0.0
    %117 = vmatprep.subr.mxu0 0.0
    %118 = vmatpush2.msra.mxu0 0.0
    %119 = vmatprep.subr.mxu0 0.0
    %120 = vmatpush2.msra.mxu0 0.0
    %121 = vmatprep.subr.mxu0 0.0
    %122 = vmatpush2.msra.mxu0 0.0
    %123 = vmatprep.subr.mxu0 0.0
    %124 = vmatpush2.msra.mxu0 0.0
    %125 = vmatprep.subr.mxu0 0.0
    %126 = vmatpush2.msra.mxu0 0.0
    %127 = vmatprep.subr.mxu0 0.0
    %128 = vmatpush2.msra.mxu0 0.0
    %129 = vmatprep.subr.mxu0 0.0
    %130 = vmatpush2.msra.mxu0 0.0
    %131 = vmatprep.subr.mxu0 0.0
    %132 = vmatpush2.msra.mxu0 0.0
    %133 = vmatprep.subr.mxu0 0.0
    %134 = vmatpush2.msra.mxu0 0.0
    %135 = vmatprep.mubr.f32.mxu0 0.0
    %136 = vmatmul.mubr.f32.gmra.mxu0 %v48
    %v137 = vpop.f32.mrf.mxu0
    %v138 = vadd.f32 %v34, %v137
    %v139 = vpop.f32.mrf.mxu0
    %v140 = vadd.f32 %v38, %v139
    %141 = vmatprep.mubr.f32.mxu0 0.0
    %142 = vmatmul.mubr.f32.gmra.mxu0 %v51
    %v143 = vpop.f32.mrf.mxu0
    %v144 = vadd.f32 %v34, %v143
    %v145 = vpop.f32.mrf.mxu0
    %v146 = vadd.f32 %v38, %v145
    %147 = vmatprep.mubr.f32.mxu0 0.0
    %148 = vmatmul.mubr.f32.gmra.mxu0 %v54
    %v149 = vpop.f32.mrf.mxu0
    %v150 = vadd.f32 %v34, %v149
    %v151 = vpop.f32.mrf.mxu0
    %v152 = vadd.f32 %v38, %v151
    %153 = vmatprep.mubr.f32.mxu0 0.0
    %154 = vmatmul.mubr.f32.gmra.mxu0 %v57
    %v155 = vpop.f32.mrf.mxu0
    %v156 = vadd.f32 %v34, %v155
    %v157 = vpop.f32.mrf.mxu0
    %v158 = vadd.f32 %v38, %v157
    %159 = vmatprep.mubr.f32.mxu0 0.0
    %160 = vmatmul.mubr.f32.gmra.mxu0 %v60
    %v161 = vpop.f32.mrf.mxu0
    %v162 = vadd.f32 %v34, %v161
    %v163 = vpop.f32.mrf.mxu0
    %v164 = vadd.f32 %v38, %v163
    %165 = vmatprep.mubr.f32.mxu0 0.0
    %166 = vmatmul.mubr.f32.gmra.mxu0 %v63
    %v167 = vpop.f32.mrf.mxu0
    %v168 = vadd.f32 %v34, %v167
    %v169 = vpop.f32.mrf.mxu0
    %v170 = vadd.f32 %v38, %v169
    %171 = vmatprep.mubr.f32.mxu0 0.0
    %172 = vmatmul.mubr.f32.gmra.mxu0 %v66
    %v173 = vpop.f32.mrf.mxu0
    %v174 = vadd.f32 %v34, %v173
    %v175 = vpop.f32.mrf.mxu0
    %v176 = vadd.f32 %v38, %v175
    %177 = vmatprep.mubr.f32.mxu0 0.0
    %178 = vmatmul.mubr.f32.gmra.mxu0 %v69
    %v179 = vpop.f32.mrf.mxu0
    %v180 = vadd.f32 %v34, %v179
    %v181 = vpop.f32.mrf.mxu0
    %v182 = vadd.f32 %v38, %v181
    %183 = vdwg.mxu0
    %184 = vmatprep.subr.mxu0 0.0
    %185 = vmatpush1.msra.mxu0 0.0
    %186 = vmatprep.subr.mxu0 0.0
    %187 = vmatpush1.msra.mxu0 0.0
    %188 = vmatprep.subr.mxu0 0.0
    %189 = vmatpush1.msra.mxu0 0.0
    %190 = vmatprep.subr.mxu0 0.0
    %191 = vmatpush1.msra.mxu0 0.0
    %192 = vmatprep.subr.mxu0 0.0
    %193 = vmatpush1.msra.mxu0 0.0
    %194 = vmatprep.subr.mxu0 0.0
    %195 = vmatpush1.msra.mxu0 0.0
    %196 = vmatprep.subr.mxu0 0.0
    %197 = vmatpush1.msra.mxu0 0.0
    %198 = vmatprep.subr.mxu0 0.0
    %199 = vmatpush1.msra.mxu0 0.0
    %200 = vmatprep.subr.mxu0 0.0
    %201 = vmatpush1.msra.mxu0 0.0
    %202 = vmatprep.subr.mxu0 0.0
    %203 = vmatpush1.msra.mxu0 0.0
    %204 = vmatprep.subr.mxu0 0.0
    %205 = vmatpush1.msra.mxu0 0.0
    %206 = vmatprep.subr.mxu0 0.0
    %207 = vmatpush1.msra.mxu0 0.0
    %208 = vmatprep.subr.mxu0 0.0
    %209 = vmatpush1.msra.mxu0 0.0
    %210 = vmatprep.subr.mxu0 0.0
    %211 = vmatpush1.msra.mxu0 0.0
    %212 = vmatprep.subr.mxu0 0.0
    %213 = vmatpush1.msra.mxu0 %v28
    %214 = vmatprep.subr.mxu0 0.0
    %215 = vmatpush1.msra.mxu0 %v25
    %216 = vmatprep.subr.mxu0 0.0
    %217 = vmatpush2.msra.mxu0 0.0
    %218 = vmatprep.subr.mxu0 0.0
    %219 = vmatpush2.msra.mxu0 0.0
    %220 = vmatprep.subr.mxu0 0.0
    %221 = vmatpush2.msra.mxu0 0.0
    %222 = vmatprep.subr.mxu0 0.0
    %223 = vmatpush2.msra.mxu0 0.0
    %224 = vmatprep.subr.mxu0 0.0
    %225 = vmatpush2.msra.mxu0 0.0
    %226 = vmatprep.subr.mxu0 0.0
    %227 = vmatpush2.msra.mxu0 0.0
    %228 = vmatprep.subr.mxu0 0.0
    %229 = vmatpush2.msra.mxu0 0.0
    %230 = vmatprep.subr.mxu0 0.0
    %231 = vmatpush2.msra.mxu0 0.0
    %232 = vmatprep.subr.mxu0 0.0
    %233 = vmatpush2.msra.mxu0 0.0
    %234 = vmatprep.subr.mxu0 0.0
    %235 = vmatpush2.msra.mxu0 0.0
    %236 = vmatprep.subr.mxu0 0.0
    %237 = vmatpush2.msra.mxu0 0.0
    %238 = vmatprep.subr.mxu0 0.0
    %239 = vmatpush2.msra.mxu0 0.0
    %240 = vmatprep.subr.mxu0 0.0
    %241 = vmatpush2.msra.mxu0 0.0
    %242 = vmatprep.subr.mxu0 0.0
    %243 = vmatpush2.msra.mxu0 0.0
    %244 = vmatprep.subr.mxu0 0.0
    %245 = vmatpush2.msra.mxu0 0.0
    %246 = vmatprep.subr.mxu0 0.0
    %247 = vmatpush2.msra.mxu0 0.0
    %248 = vmatprep.mubr.f32.mxu0 0.0
    %249 = vmatmul.mubr.f32.gmra.mxu0 %v48
    %v250 = vpop.f32.mrf.mxu0
    %v251 = vadd.f32 %v42, %v250
    %v252 = vpop.f32.mrf.mxu0
    %253 = vmatprep.mubr.f32.mxu0 0.0
    %254 = vmatmul.mubr.f32.gmra.mxu0 %v51
    %v255 = vpop.f32.mrf.mxu0
    %v256 = vadd.f32 %v42, %v255
    %v257 = vpop.f32.mrf.mxu0
    %258 = vmatprep.mubr.f32.mxu0 0.0
    %259 = vmatmul.mubr.f32.gmra.mxu0 %v54
    %v260 = vpop.f32.mrf.mxu0
    %v261 = vadd.f32 %v42, %v260
    %v262 = vpop.f32.mrf.mxu0
    %263 = vmatprep.mubr.f32.mxu0 0.0
    %264 = vmatmul.mubr.f32.gmra.mxu0 %v57
    %v265 = vpop.f32.mrf.mxu0
    %v266 = vadd.f32 %v42, %v265
    %v267 = vpop.f32.mrf.mxu0
    %268 = vmatprep.mubr.f32.mxu0 0.0
    %269 = vmatmul.mubr.f32.gmra.mxu0 %v60
    %v270 = vpop.f32.mrf.mxu0
    %v271 = vadd.f32 %v42, %v270
    %v272 = vpop.f32.mrf.mxu0
    %273 = vmatprep.mubr.f32.mxu0 0.0
    %274 = vmatmul.mubr.f32.gmra.mxu0 %v63
    %v275 = vpop.f32.mrf.mxu0
    %v276 = vadd.f32 %v42, %v275
    %v277 = vpop.f32.mrf.mxu0
    %278 = vmatprep.mubr.f32.mxu0 0.0
    %279 = vmatmul.mubr.f32.gmra.mxu0 %v66
    %v280 = vpop.f32.mrf.mxu0
    %v281 = vadd.f32 %v42, %v280
    %v282 = vpop.f32.mrf.mxu0
    %283 = vmatprep.mubr.f32.mxu0 0.0
    %284 = vmatmul.mubr.f32.gmra.mxu0 %v69
    %v285 = vpop.f32.mrf.mxu0
    %v286 = vadd.f32 %v42, %v285
    %v287 = vpop.f32.mrf.mxu0
    %288 = vdwg.mxu0
    %289 = vst [vmem:[#allocation2] sm:$0xff] %v138
    %290 = vst [vmem:[#allocation2 + $0x8] sm:$0xff] %v140
    %291 = vst [vmem:[#allocation2 + $0x10] sm:$0xff] %v251
    %292 = vst [vmem:[#allocation2 + $0x18] sm:$0xff] %v144
    %293 = vst [vmem:[#allocation2 + $0x20] sm:$0xff] %v146
    %294 = vst [vmem:[#allocation2 + $0x28] sm:$0xff] %v256
    %295 = vst [vmem:[#allocation2 + $0x30] sm:$0xff] %v150
    %296 = vst [vmem:[#allocation2 + $0x38] sm:$0xff] %v152
    %297 = vst [vmem:[#allocation2 + $0x40] sm:$0xff] %v261
    %298 = vst [vmem:[#allocation2 + $0x48] sm:$0xff] %v156
    %299 = vst [vmem:[#allocation2 + $0x50] sm:$0xff] %v158
    %300 = vst [vmem:[#allocation2 + $0x58] sm:$0xff] %v266
    %301 = vst [vmem:[#allocation2 + $0x60] sm:$0xff] %v162
    %302 = vst [vmem:[#allocation2 + $0x68] sm:$0xff] %v164
    %303 = vst [vmem:[#allocation2 + $0x70] sm:$0xff] %v271
    %304 = vst [vmem:[#allocation2 + $0x78] sm:$0xff] %v168
    %305 = vst [vmem:[#allocation2 + $0x80] sm:$0xff] %v170
    %306 = vst [vmem:[#allocation2 + $0x88] sm:$0xff] %v276
    %307 = vst [vmem:[#allocation2 + $0x90] sm:$0xff] %v174
    %308 = vst [vmem:[#allocation2 + $0x98] sm:$0xff] %v176
    %309 = vst [vmem:[#allocation2 + $0xa0] sm:$0xff] %v281
    %310 = vst [vmem:[#allocation2 + $0xa8] sm:$0xff] %v180
    %311 = vst [vmem:[#allocation2 + $0xb0] sm:$0xff] %v182
    %312 = vst [vmem:[#allocation2 + $0xb8] sm:$0xff] %v286
    // Predicated region
    $region14: #{tpu_custom_call.1} parent=1 // pred_check
      _
    $region15: #{tpu_custom_call.1} parent=1 // pred_check_branch
      %314 = sbr.rel (0) target = $region17
    $region16: #{tpu_custom_call.1} parent=1 // pred_region
      %s316 = ssub.s32 3072, 3072
      %317 = vsyncadd [#allocation3], %s316
      %s318 = sshll.u32 [#allocation2], 4
      %s319 = int_to_ptr.vmem [resolvable:$true] %s318
      %324 = dma.vmem_to_hbm [thread:$0]  %s319, 3072, %s3, [#allocation3], 384, 384, 24
    $region17: #{tpu_custom_call.1} parent=1 // pred_fallthru
      _
    // Predicated region
    $region18: #{tpu_custom_call.1} parent=1 // pred_check
      _
    $region19: #{tpu_custom_call.1} parent=1 // pred_check_branch
      %326 = sbr.rel (0) target = $region21
    $region20: #{tpu_custom_call.1} parent=1 // pred_region
      %327 = dma.done [#allocation3], 3072
    $region21: #{tpu_custom_call.1} parent=1 // pred_fallthru
      _
    %328 = vsyncpa [#allocation3], 1

</llo_original>
